<compile_context>
chip_gen: v7x
topology: tpu7x:2x2x1
jax: 0.10.0
libtpu: 0.0.40
codegen_flags: <defaults>
</compile_context>

<pallas_src>
import functools

import jax
import jax.numpy as jnp
from jax.experimental import pallas as pl
from jax.experimental.pallas import tpu as pltpu


def _dc_ce_kernel(cls_ref, x_ref, t_ref,
                  tp_ref, ps_ref, cnt_ref, ce_ref,
                  *, nc, tile_w, n_t_inner, needs_mask):
    """One grid step over a (C, S, tile_w) tile of logits.

    Outputs (tiny, resident across the reduction axis):
      tp_ref  (C, S, 1): sum of p at the target class
      ps_ref  (C, S, 1): sum of p per class
      cnt_ref (C, S, 1): per-class label counts
      ce_ref  (1, S, 1): sum of per-pixel cross entropy
    """
    t_idx = pl.program_id(2)

    @pl.when(t_idx == 0)
    def _():
        tp_ref[...] = jnp.zeros_like(tp_ref)
        ps_ref[...] = jnp.zeros_like(ps_ref)
        cnt_ref[...] = jnp.zeros_like(cnt_ref)
        ce_ref[...] = jnp.zeros_like(ce_ref)

    x = x_ref[...].astype(jnp.float32)      # (C, S, T) logits, classes leading
    lbl = t_ref[...]                        # (1, S, T) int32 labels
    cls = cls_ref[...]                      # (C, S, 1) int32 class ids
    _, s_dim, t_dim = x.shape

    if needs_mask:
        # Partial last tile: lanes past the valid column count hold garbage
        # from the padded block read; zero the logits and mask contributions.
        flat = pl.program_id(0) * n_t_inner + t_idx
        valid = nc - flat * tile_w
        col = jax.lax.broadcasted_iota(jnp.int32, (1, s_dim, t_dim), 2)
        ok = col < valid
        x = jnp.where(ok, x, 0.0)

    # softmax over the class (leading) axis == PyTorch softmax over dim=1
    m = jnp.max(x, axis=0, keepdims=True)           # (1, S, T)
    e = jnp.exp(x - m)                              # (C, S, T)
    ssum = jnp.sum(e, axis=0, keepdims=True)        # (1, S, T)
    p = e * (1.0 / ssum)                            # (C, S, T) probabilities
    lse = m + jnp.log(ssum)                         # (1, S, T)

    sel = cls == lbl                                # (C, S, T) boolean one-hot
    x_t = jnp.sum(jnp.where(sel, x, 0.0), axis=0, keepdims=True)   # (1, S, T)
    ce_px = lse - x_t                               # per-pixel cross entropy

    if needs_mask:
        sel = jnp.logical_and(sel, ok)
        ce_px = jnp.where(ok, ce_px, 0.0)
        p_src = jnp.where(ok, p, 0.0)
    else:
        p_src = p

    # Lane (minor-axis) reductions only; the tiny sublane/class finish happens
    # in the wrapper.  Accumulate straight into the resident output blocks.
    tp_ref[...] += jnp.sum(jnp.where(sel, p, 0.0), axis=2, keepdims=True)
    ps_ref[...] += jnp.sum(p_src, axis=2, keepdims=True)
    cnt_ref[...] += jnp.sum(sel.astype(jnp.float32), axis=2, keepdims=True)
    ce_ref[...] += jnp.sum(ce_px, axis=2, keepdims=True)


def _pick_layout(hw, c, x_itemsize, vmem_input_budget):
    """Choose sublane packing S and column tile width under a VMEM budget."""
    s = 1
    for cand in (8, 4, 2):
        if hw % cand == 0:
            s = cand
            break
    nc = hw // s
    # double-buffered logits block + int32 label block, per column
    bytes_per_col = 2 * s * (c * x_itemsize + 4)
    cap = max(128, (vmem_input_budget // bytes_per_col) // 128 * 128)
    tile_w = nc if nc <= cap else cap
    return s, nc, tile_w


def dc_and_ce_loss(net_output, target, *, weight_ce=1.0, weight_dice=1.0,
                   smooth=1e-5, vmem_input_budget=12 * 1024 * 1024):
    B, C, H, W = net_output.shape
    assert target.shape == (B, 1, H, W), "target must be (b, 1, x, y)"
    HW = H * W
    N = B * HW

    x_itemsize = jnp.dtype(net_output.dtype).itemsize
    S, NC, tile_w = _pick_layout(HW, C, x_itemsize, vmem_input_budget)
    n_t_total = -(-NC // tile_w)
    needs_mask = (NC % tile_w) != 0

    # Split the pixel range across 2 parallel chunks when B is odd so both
    # v7x TensorCores get balanced work (no-op elsewhere).
    n_par = 2 if (B % 2 == 1 and n_t_total % 2 == 0) else 1
    n_t_inner = n_t_total // n_par
    PB = n_par * B

    # Pure reshapes of NCHW (no transpose, no extra HBM copy): pixels packed as
    # (S sublanes, NC lanes), classes on the leading axis.
    logits = net_output.reshape(B, C, S, NC)
    tgt = target.reshape(B, 1, S, NC).astype(jnp.int32)
    cls_arr = jnp.broadcast_to(
        jnp.arange(C, dtype=jnp.int32).reshape(C, 1, 1), (C, S, 1))

    kernel = functools.partial(_dc_ce_kernel, nc=NC, tile_w=tile_w,
                               n_t_inner=n_t_inner, needs_mask=needs_mask)

    in_block_bytes = S * tile_w * (C * x_itemsize + 4)
    vmem_limit = int(min(max(2 * in_block_bytes + (4 << 20), 16 << 20), 48 << 20))

    stat_shape = (PB, C, S, 1)
    tp, ps, cnt, ce = pl.pallas_call(
        kernel,
        out_shape=(jax.ShapeDtypeStruct(stat_shape, jnp.float32),   # tp
                   jax.ShapeDtypeStruct(stat_shape, jnp.float32),   # sum(p)
                   jax.ShapeDtypeStruct(stat_shape, jnp.float32),   # label count
                   jax.ShapeDtypeStruct((PB, 1, S, 1), jnp.float32)),  # CE sum
        grid_spec=pltpu.PrefetchScalarGridSpec(
            num_scalar_prefetch=0,
            grid=(n_par, B, n_t_inner),
            in_specs=[
                pl.BlockSpec((C, S, 1), lambda par, b, t: (0, 0, 0)),
                pl.BlockSpec((None, C, S, tile_w),
                             lambda par, b, t: (b, 0, 0, par * n_t_inner + t)),
                pl.BlockSpec((None, 1, S, tile_w),
                             lambda par, b, t: (b, 0, 0, par * n_t_inner + t)),
            ],
            out_specs=[
                pl.BlockSpec((None, C, S, 1),
                             lambda par, b, t: (par * B + b, 0, 0, 0)),
                pl.BlockSpec((None, C, S, 1),
                             lambda par, b, t: (par * B + b, 0, 0, 0)),
                pl.BlockSpec((None, C, S, 1),
                             lambda par, b, t: (par * B + b, 0, 0, 0)),
                pl.BlockSpec((None, 1, S, 1),
                             lambda par, b, t: (par * B + b, 0, 0, 0)),
            ]),
        compiler_params=pltpu.CompilerParams(
            dimension_semantics=("parallel", "parallel", "arbitrary"),
            vmem_limit_bytes=vmem_limit),
    )(cls_arr, logits, tgt)

    # Finish the tiny reductions host-side (batch_dice=True sums batch+spatial).
    tp_c = jnp.sum(tp, axis=(0, 2, 3))      # (C,)
    ps_c = jnp.sum(ps, axis=(0, 2, 3))
    cnt_c = jnp.sum(cnt, axis=(0, 2, 3))
    fp_c = ps_c - tp_c
    fn_c = cnt_c - tp_c

    # SoftDiceLoss finalize (batch_dice=True, do_bg=False, smooth=1e-5)
    dc = (2.0 * tp_c + smooth) / jnp.maximum(2.0 * tp_c + fp_c + fn_c + smooth, 1e-8)
    dc_loss = -jnp.mean(dc[1:])             # drop background

    # CrossEntropyLoss finalize (mean over all pixels)
    ce_loss = jnp.sum(ce) / N

    return weight_ce * ce_loss + weight_dice * dc_loss


def _reference(net_output, target, *, weight_ce=1.0, weight_dice=1.0, smooth=1e-5):
    """Pure-JAX reference matching the PyTorch module semantics."""
    B, C, H, W = net_output.shape
    p = jax.nn.softmax(net_output, axis=1)
    onehot = jax.nn.one_hot(target[:, 0], C, axis=1)         # (B, C, H, W)
    axes = (0, 2, 3)                                         # batch_dice=True
    tp = jnp.sum(p * onehot, axes)
    fp = jnp.sum(p * (1.0 - onehot), axes)
    fn = jnp.sum((1.0 - p) * onehot, axes)
    dc = (2.0 * tp + smooth) / jnp.maximum(2.0 * tp + fp + fn + smooth, 1e-8)
    dc_loss = -jnp.mean(dc[1:])                              # do_bg=False
    logp = jax.nn.log_softmax(net_output, axis=1)
    ce_loss = -jnp.mean(jnp.sum(logp * onehot, axis=1))
    return weight_ce * ce_loss + weight_dice * dc_loss


if __name__ == "__main__":
    key = jax.random.PRNGKey(0)
    B, C, H, W = 2, 4, 16, 16
    k1, k2 = jax.random.split(key)
    net_output = jax.random.normal(k1, (B, C, H, W), dtype=jnp.float32)
    target = jax.random.randint(k2, (B, 1, H, W), 0, C, dtype=jnp.int32)

    loss = jax.block_until_ready(dc_and_ce_loss(net_output, target))
    ref = jax.block_until_ready(_reference(net_output, target))

    assert jnp.isfinite(loss), "loss is not finite"
    assert jnp.allclose(loss, ref, rtol=1e-4, atol=1e-5), (loss, ref)
    print("KERNEL_OK")
</pallas_src>

<mosaic_0001>
module attributes {stable_mosaic.version = 11 : i64} {
  func.func @_dc_ce_kernel(%arg0: i32, %arg1: i32, %arg2: i32, %arg3: memref<4x8x1xi32, #tpu.memory_space<vmem>>, %arg4: memref<1x4x8x32xf32, #tpu.memory_space<vmem>>, %arg5: memref<1x1x8x32xi32, #tpu.memory_space<vmem>>, %arg6: memref<1x4x8x1xf32, #tpu.memory_space<vmem>>, %arg7: memref<1x4x8x1xf32, #tpu.memory_space<vmem>>, %arg8: memref<1x4x8x1xf32, #tpu.memory_space<vmem>>, %arg9: memref<1x1x8x1xf32, #tpu.memory_space<vmem>>) attributes {dimension_semantics = [#tpu.dimension_semantics<parallel>, #tpu.dimension_semantics<parallel>, #tpu.dimension_semantics<arbitrary>], iteration_bounds = array<i64: 1, 2, 1>, scalar_prefetch = 0 : i64, scratch_operands = 0 : i64, tpu.core_type = #tpu.core_type<tc>, window_params = [{pipeline_mode = #tpu.pipeline_mode<synchronous>, transform_indices = @transform_0, window_bounds = array<i64: 4, 8, 1>}, {transform_indices = @transform_1, window_bounds = array<i64: 1, 4, 8, 32>}, {transform_indices = @transform_2, window_bounds = array<i64: 1, 1, 8, 32>}, {transform_indices = @transform_3, window_bounds = array<i64: 1, 4, 8, 1>}, {transform_indices = @transform_4, window_bounds = array<i64: 1, 4, 8, 1>}, {transform_indices = @transform_5, window_bounds = array<i64: 1, 4, 8, 1>}, {transform_indices = @transform_6, window_bounds = array<i64: 1, 1, 8, 1>}]} {
    %c0_i32 = arith.constant 0 : i32
    %0 = arith.cmpi eq, %arg2, %c0_i32 : i32
    %1 = arith.extui %0 : i1 to i32
    %c0_i32_0 = arith.constant 0 : i32
    %2 = arith.cmpi ne, %1, %c0_i32_0 : i32
    scf.if %2 {
      %cst_52 = arith.constant 0.000000e+00 : f32
      %65 = vector.broadcast %cst_52 : f32 to vector<4x8x1xf32>
      %c0_53 = arith.constant 0 : index
      %c0_54 = arith.constant 0 : index
      %c0_55 = arith.constant 0 : index
      %c0_56 = arith.constant 0 : index
      %66 = vector.load %arg6[%c0_53, %c0_54, %c0_55, %c0_56] : memref<1x4x8x1xf32, #tpu.memory_space<vmem>>, vector<1x4x8x1xf32>
      %67 = vector.shape_cast %66 : vector<1x4x8x1xf32> to vector<4x8x1xf32>
      %68 = vector.shape_cast %65 : vector<4x8x1xf32> to vector<1x4x8x1xf32>
      tpu.vector_store %arg6[%c0_53, %c0_54, %c0_55, %c0_56], %68 {strides = array<i32>} : memref<1x4x8x1xf32, #tpu.memory_space<vmem>>, vector<1x4x8x1xf32>,
      %cst_57 = arith.constant 0.000000e+00 : f32
      %69 = vector.broadcast %cst_57 : f32 to vector<4x8x1xf32>
      %c0_58 = arith.constant 0 : index
      %c0_59 = arith.constant 0 : index
      %c0_60 = arith.constant 0 : index
      %c0_61 = arith.constant 0 : index
      %70 = vector.load %arg7[%c0_58, %c0_59, %c0_60, %c0_61] : memref<1x4x8x1xf32, #tpu.memory_space<vmem>>, vector<1x4x8x1xf32>
      %71 = vector.shape_cast %70 : vector<1x4x8x1xf32> to vector<4x8x1xf32>
      %72 = vector.shape_cast %69 : vector<4x8x1xf32> to vector<1x4x8x1xf32>
      tpu.vector_store %arg7[%c0_58, %c0_59, %c0_60, %c0_61], %72 {strides = array<i32>} : memref<1x4x8x1xf32, #tpu.memory_space<vmem>>, vector<1x4x8x1xf32>,
      %cst_62 = arith.constant 0.000000e+00 : f32
      %73 = vector.broadcast %cst_62 : f32 to vector<4x8x1xf32>
      %c0_63 = arith.constant 0 : index
      %c0_64 = arith.constant 0 : index
      %c0_65 = arith.constant 0 : index
      %c0_66 = arith.constant 0 : index
      %74 = vector.load %arg8[%c0_63, %c0_64, %c0_65, %c0_66] : memref<1x4x8x1xf32, #tpu.memory_space<vmem>>, vector<1x4x8x1xf32>
      %75 = vector.shape_cast %74 : vector<1x4x8x1xf32> to vector<4x8x1xf32>
      %76 = vector.shape_cast %73 : vector<4x8x1xf32> to vector<1x4x8x1xf32>
      tpu.vector_store %arg8[%c0_63, %c0_64, %c0_65, %c0_66], %76 {strides = array<i32>} : memref<1x4x8x1xf32, #tpu.memory_space<vmem>>, vector<1x4x8x1xf32>,
      %cst_67 = arith.constant 0.000000e+00 : f32
      %77 = vector.broadcast %cst_67 : f32 to vector<1x8x1xf32>
      %c0_68 = arith.constant 0 : index
      %c0_69 = arith.constant 0 : index
      %c0_70 = arith.constant 0 : index
      %c0_71 = arith.constant 0 : index
      %78 = vector.load %arg9[%c0_68, %c0_69, %c0_70, %c0_71] : memref<1x1x8x1xf32, #tpu.memory_space<vmem>>, vector<1x1x8x1xf32>
      %79 = vector.shape_cast %78 : vector<1x1x8x1xf32> to vector<1x8x1xf32>
      %80 = vector.shape_cast %77 : vector<1x8x1xf32> to vector<1x1x8x1xf32>
      tpu.vector_store %arg9[%c0_68, %c0_69, %c0_70, %c0_71], %80 {strides = array<i32>} : memref<1x1x8x1xf32, #tpu.memory_space<vmem>>, vector<1x1x8x1xf32>,
    } else {
    }
    %c0 = arith.constant 0 : index
    %c0_1 = arith.constant 0 : index
    %c0_2 = arith.constant 0 : index
    %c0_3 = arith.constant 0 : index
    %3 = vector.load %arg4[%c0, %c0_1, %c0_2, %c0_3] : memref<1x4x8x32xf32, #tpu.memory_space<vmem>>, vector<1x4x8x32xf32>
    %4 = vector.shape_cast %3 : vector<1x4x8x32xf32> to vector<4x8x32xf32>
    %c0_4 = arith.constant 0 : index
    %c0_5 = arith.constant 0 : index
    %c0_6 = arith.constant 0 : index
    %c0_7 = arith.constant 0 : index
    %5 = vector.load %arg5[%c0_4, %c0_5, %c0_6, %c0_7] : memref<1x1x8x32xi32, #tpu.memory_space<vmem>>, vector<1x1x8x32xi32>
    %6 = vector.shape_cast %5 : vector<1x1x8x32xi32> to vector<1x8x32xi32>
    %c0_8 = arith.constant 0 : index
    %c0_9 = arith.constant 0 : index
    %c0_10 = arith.constant 0 : index
    %7 = vector.load %arg3[%c0_8, %c0_9, %c0_10] : memref<4x8x1xi32, #tpu.memory_space<vmem>>, vector<4x8x1xi32>
    %cst = arith.constant dense<0xFF800000> : vector<8x32xf32>
    %8 = vector.multi_reduction <maximumf>, %4, %cst [0] : vector<4x8x32xf32> to vector<8x32xf32>
    %9 = vector.shape_cast %8 : vector<8x32xf32> to vector<1x8x32xf32>
    %10 = vector.broadcast %9 : vector<1x8x32xf32> to vector<4x8x32xf32>
    %11 = arith.subf %4, %10 : vector<4x8x32xf32>
    %12 = math.exp %11 : vector<4x8x32xf32>
    %cst_11 = arith.constant dense<0.000000e+00> : vector<8x32xf32>
    %13 = vector.multi_reduction <add>, %12, %cst_11 [0] : vector<4x8x32xf32> to vector<8x32xf32>
    %14 = vector.shape_cast %13 : vector<8x32xf32> to vector<1x8x32xf32>
    %cst_12 = arith.constant 1.000000e+00 : f32
    %15 = vector.broadcast %cst_12 : f32 to vector<1x8x32xf32>
    %16 = arith.divf %15, %14 : vector<1x8x32xf32>
    %17 = vector.broadcast %16 : vector<1x8x32xf32> to vector<4x8x32xf32>
    %18 = arith.mulf %12, %17 : vector<4x8x32xf32>
    %19 = math.log %14 : vector<1x8x32xf32>
    %20 = arith.addf %9, %19 : vector<1x8x32xf32>
    %21 = vector.broadcast %7 : vector<4x8x1xi32> to vector<4x8x32xi32>
    %22 = vector.broadcast %6 : vector<1x8x32xi32> to vector<4x8x32xi32>
    %23 = arith.cmpi eq, %21, %22 : vector<4x8x32xi32>
    %cst_13 = arith.constant 0.000000e+00 : f32
    %24 = vector.broadcast %cst_13 : f32 to vector<4x8x32xf32>
    %25 = arith.select %23, %4, %24 : vector<4x8x32xi1>, vector<4x8x32xf32>
    %cst_14 = arith.constant dense<0.000000e+00> : vector<8x32xf32>
    %26 = vector.multi_reduction <add>, %25, %cst_14 [0] : vector<4x8x32xf32> to vector<8x32xf32>
    %27 = vector.shape_cast %26 : vector<8x32xf32> to vector<1x8x32xf32>
    %28 = arith.subf %20, %27 : vector<1x8x32xf32>
    %c0_15 = arith.constant 0 : index
    %c0_16 = arith.constant 0 : index
    %c0_17 = arith.constant 0 : index
    %c0_18 = arith.constant 0 : index
    %29 = vector.load %arg6[%c0_15, %c0_16, %c0_17, %c0_18] : memref<1x4x8x1xf32, #tpu.memory_space<vmem>>, vector<1x4x8x1xf32>
    %30 = vector.shape_cast %29 : vector<1x4x8x1xf32> to vector<4x8x1xf32>
    %cst_19 = arith.constant 0.000000e+00 : f32
    %31 = vector.broadcast %cst_19 : f32 to vector<4x8x32xf32>
    %32 = arith.select %23, %18, %31 : vector<4x8x32xi1>, vector<4x8x32xf32>
    %cst_20 = arith.constant dense<0.000000e+00> : vector<4x8xf32>
    %33 = vector.multi_reduction <add>, %32, %cst_20 [2] : vector<4x8x32xf32> to vector<4x8xf32>
    %34 = vector.shape_cast %33 : vector<4x8xf32> to vector<4x8x1xf32>
    %35 = arith.addf %30, %34 : vector<4x8x1xf32>
    %c0_21 = arith.constant 0 : index
    %c0_22 = arith.constant 0 : index
    %c0_23 = arith.constant 0 : index
    %c0_24 = arith.constant 0 : index
    %36 = vector.load %arg6[%c0_21, %c0_22, %c0_23, %c0_24] : memref<1x4x8x1xf32, #tpu.memory_space<vmem>>, vector<1x4x8x1xf32>
    %37 = vector.shape_cast %36 : vector<1x4x8x1xf32> to vector<4x8x1xf32>
    %38 = vector.shape_cast %35 : vector<4x8x1xf32> to vector<1x4x8x1xf32>
    tpu.vector_store %arg6[%c0_21, %c0_22, %c0_23, %c0_24], %38 {strides = array<i32>} : memref<1x4x8x1xf32, #tpu.memory_space<vmem>>, vector<1x4x8x1xf32>,
    %c0_25 = arith.constant 0 : index
    %c0_26 = arith.constant 0 : index
    %c0_27 = arith.constant 0 : index
    %c0_28 = arith.constant 0 : index
    %39 = vector.load %arg7[%c0_25, %c0_26, %c0_27, %c0_28] : memref<1x4x8x1xf32, #tpu.memory_space<vmem>>, vector<1x4x8x1xf32>
    %40 = vector.shape_cast %39 : vector<1x4x8x1xf32> to vector<4x8x1xf32>
    %cst_29 = arith.constant dense<0.000000e+00> : vector<4x8xf32>
    %41 = vector.multi_reduction <add>, %18, %cst_29 [2] : vector<4x8x32xf32> to vector<4x8xf32>
    %42 = vector.shape_cast %41 : vector<4x8xf32> to vector<4x8x1xf32>
    %43 = arith.addf %40, %42 : vector<4x8x1xf32>
    %c0_30 = arith.constant 0 : index
    %c0_31 = arith.constant 0 : index
    %c0_32 = arith.constant 0 : index
    %c0_33 = arith.constant 0 : index
    %44 = vector.load %arg7[%c0_30, %c0_31, %c0_32, %c0_33] : memref<1x4x8x1xf32, #tpu.memory_space<vmem>>, vector<1x4x8x1xf32>
    %45 = vector.shape_cast %44 : vector<1x4x8x1xf32> to vector<4x8x1xf32>
    %46 = vector.shape_cast %43 : vector<4x8x1xf32> to vector<1x4x8x1xf32>
    tpu.vector_store %arg7[%c0_30, %c0_31, %c0_32, %c0_33], %46 {strides = array<i32>} : memref<1x4x8x1xf32, #tpu.memory_space<vmem>>, vector<1x4x8x1xf32>,
    %c0_34 = arith.constant 0 : index
    %c0_35 = arith.constant 0 : index
    %c0_36 = arith.constant 0 : index
    %c0_37 = arith.constant 0 : index
    %47 = vector.load %arg8[%c0_34, %c0_35, %c0_36, %c0_37] : memref<1x4x8x1xf32, #tpu.memory_space<vmem>>, vector<1x4x8x1xf32>
    %48 = vector.shape_cast %47 : vector<1x4x8x1xf32> to vector<4x8x1xf32>
    %49 = arith.extui %23 : vector<4x8x32xi1> to vector<4x8x32xi32>
    %50 = arith.sitofp %49 : vector<4x8x32xi32> to vector<4x8x32xf32>
    %cst_38 = arith.constant dense<0.000000e+00> : vector<4x8xf32>
    %51 = vector.multi_reduction <add>, %50, %cst_38 [2] : vector<4x8x32xf32> to vector<4x8xf32>
    %52 = vector.shape_cast %51 : vector<4x8xf32> to vector<4x8x1xf32>
    %53 = arith.addf %48, %52 : vector<4x8x1xf32>
    %c0_39 = arith.constant 0 : index
    %c0_40 = arith.constant 0 : index
    %c0_41 = arith.constant 0 : index
    %c0_42 = arith.constant 0 : index
    %54 = vector.load %arg8[%c0_39, %c0_40, %c0_41, %c0_42] : memref<1x4x8x1xf32, #tpu.memory_space<vmem>>, vector<1x4x8x1xf32>
    %55 = vector.shape_cast %54 : vector<1x4x8x1xf32> to vector<4x8x1xf32>
    %56 = vector.shape_cast %53 : vector<4x8x1xf32> to vector<1x4x8x1xf32>
    tpu.vector_store %arg8[%c0_39, %c0_40, %c0_41, %c0_42], %56 {strides = array<i32>} : memref<1x4x8x1xf32, #tpu.memory_space<vmem>>, vector<1x4x8x1xf32>,
    %c0_43 = arith.constant 0 : index
    %c0_44 = arith.constant 0 : index
    %c0_45 = arith.constant 0 : index
    %c0_46 = arith.constant 0 : index
    %57 = vector.load %arg9[%c0_43, %c0_44, %c0_45, %c0_46] : memref<1x1x8x1xf32, #tpu.memory_space<vmem>>, vector<1x1x8x1xf32>
    %58 = vector.shape_cast %57 : vector<1x1x8x1xf32> to vector<1x8x1xf32>
    %cst_47 = arith.constant dense<0.000000e+00> : vector<1x8xf32>
    %59 = vector.multi_reduction <add>, %28, %cst_47 [2] : vector<1x8x32xf32> to vector<1x8xf32>
    %60 = vector.shape_cast %59 : vector<1x8xf32> to vector<1x8x1xf32>
    %61 = arith.addf %58, %60 : vector<1x8x1xf32>
    %c0_48 = arith.constant 0 : index
    %c0_49 = arith.constant 0 : index
    %c0_50 = arith.constant 0 : index
    %c0_51 = arith.constant 0 : index
    %62 = vector.load %arg9[%c0_48, %c0_49, %c0_50, %c0_51] : memref<1x1x8x1xf32, #tpu.memory_space<vmem>>, vector<1x1x8x1xf32>
    %63 = vector.shape_cast %62 : vector<1x1x8x1xf32> to vector<1x8x1xf32>
    %64 = vector.shape_cast %61 : vector<1x8x1xf32> to vector<1x1x8x1xf32>
    tpu.vector_store %arg9[%c0_48, %c0_49, %c0_50, %c0_51], %64 {strides = array<i32>} : memref<1x1x8x1xf32, #tpu.memory_space<vmem>>, vector<1x1x8x1xf32>,
    return
  }
  func.func @transform_0(%arg0: i32, %arg1: i32, %arg2: i32) -> (i32, i32, i32) {
    %c0_i32 = arith.constant 0 : i32
    %c0_i32_0 = arith.constant 0 : i32
    %c0_i32_1 = arith.constant 0 : i32
    %c0_i32_2 = arith.constant 0 : i32
    return %c0_i32, %c0_i32_0, %c0_i32_1 : i32, i32, i32
  }
  func.func @transform_1(%arg0: i32, %arg1: i32, %arg2: i32) -> (i32, i32, i32, i32) {
    %c1_i32 = arith.constant 1 : i32
    %0 = arith.muli %arg0, %c1_i32 : i32
    %1 = arith.addi %0, %arg2 : i32
    %c0_i32 = arith.constant 0 : i32
    %c0_i32_0 = arith.constant 0 : i32
    %c0_i32_1 = arith.constant 0 : i32
    return %arg1, %c0_i32, %c0_i32_0, %1 : i32, i32, i32, i32
  }
  func.func @transform_2(%arg0: i32, %arg1: i32, %arg2: i32) -> (i32, i32, i32, i32) {
    %c1_i32 = arith.constant 1 : i32
    %0 = arith.muli %arg0, %c1_i32 : i32
    %1 = arith.addi %0, %arg2 : i32
    %c0_i32 = arith.constant 0 : i32
    %c0_i32_0 = arith.constant 0 : i32
    %c0_i32_1 = arith.constant 0 : i32
    return %arg1, %c0_i32, %c0_i32_0, %1 : i32, i32, i32, i32
  }
  func.func @transform_3(%arg0: i32, %arg1: i32, %arg2: i32) -> (i32, i32, i32, i32) {
    %c2_i32 = arith.constant 2 : i32
    %0 = arith.muli %arg0, %c2_i32 : i32
    %1 = arith.addi %0, %arg1 : i32
    %c0_i32 = arith.constant 0 : i32
    %c0_i32_0 = arith.constant 0 : i32
    %c0_i32_1 = arith.constant 0 : i32
    %c0_i32_2 = arith.constant 0 : i32
    return %1, %c0_i32, %c0_i32_0, %c0_i32_1 : i32, i32, i32, i32
  }
  func.func @transform_4(%arg0: i32, %arg1: i32, %arg2: i32) -> (i32, i32, i32, i32) {
    %c2_i32 = arith.constant 2 : i32
    %0 = arith.muli %arg0, %c2_i32 : i32
    %1 = arith.addi %0, %arg1 : i32
    %c0_i32 = arith.constant 0 : i32
    %c0_i32_0 = arith.constant 0 : i32
    %c0_i32_1 = arith.constant 0 : i32
    %c0_i32_2 = arith.constant 0 : i32
    return %1, %c0_i32, %c0_i32_0, %c0_i32_1 : i32, i32, i32, i32
  }
  func.func @transform_5(%arg0: i32, %arg1: i32, %arg2: i32) -> (i32, i32, i32, i32) {
    %c2_i32 = arith.constant 2 : i32
    %0 = arith.muli %arg0, %c2_i32 : i32
    %1 = arith.addi %0, %arg1 : i32
    %c0_i32 = arith.constant 0 : i32
    %c0_i32_0 = arith.constant 0 : i32
    %c0_i32_1 = arith.constant 0 : i32
    %c0_i32_2 = arith.constant 0 : i32
    return %1, %c0_i32, %c0_i32_0, %c0_i32_1 : i32, i32, i32, i32
  }
  func.func @transform_6(%arg0: i32, %arg1: i32, %arg2: i32) -> (i32, i32, i32, i32) {
    %c2_i32 = arith.constant 2 : i32
    %0 = arith.muli %arg0, %c2_i32 : i32
    %1 = arith.addi %0, %arg1 : i32
    %c0_i32 = arith.constant 0 : i32
    %c0_i32_0 = arith.constant 0 : i32
    %c0_i32_1 = arith.constant 0 : i32
    %c0_i32_2 = arith.constant 0 : i32
    return %1, %c0_i32, %c0_i32_0, %c0_i32_1 : i32, i32, i32, i32
  }
}

</mosaic_0001>

<llo_original>
// kernel: tpu_custom_call.1
$region0: #{tpu_custom_call.1}
  #allocation0 [shape = 'u32[]', space=smem, size = 0x4, offset = 0x4, fixed_abs, tag = 'smem constant byte address 0x4 - core index']
  #allocation1 [shape = 'u32[144,128]{1,0:T(1,128)}', space=vmem, size = 0x12000, scoped, tag = 'internal scratch']
  %s0 = inlined_call_operand.vmem [shape: s32[4,8,1], index: 0, kind: input, shape index: {}]
  %s1 = inlined_call_operand.hbm [shape: f32[2,4,8,32], index: 1, kind: input, shape index: {}]
  %s2 = inlined_call_operand.vmem [shape: s32[2,1,8,32], index: 2, kind: input, shape index: {}]
  %s3 = inlined_call_operand.vmem [shape: f32[2,4,8,1], index: 3, kind: output, shape index: {0}]
  %s4 = inlined_call_operand.vmem [shape: f32[2,4,8,1], index: 4, kind: output, shape index: {1}]
  %s5 = inlined_call_operand.vmem [shape: f32[2,4,8,1], index: 5, kind: output, shape index: {2}]
  %s6 = inlined_call_operand.vmem [shape: f32[2,1,8,1], index: 6, kind: output, shape index: {3}]
  %7 = xla_tuple %s3, %s4, %s5, %s6
  %s8 = sld [smem:[#allocation0]]
  $region77: #{tpu_custom_call.1} parent=0
    _
  %s10 = ssub.s32 1, %s8
  %s11 = scalar_select 0, %s10, %s8
  $region1: #{tpu_custom_call.1} parent=0
    #allocation2 [shape = 'u8[32768]{0}', space=vmem, size = 0x8000, scoped, tag = 'input window, operand 1']
    #allocation3 [shape = 's32[2]{0}', space=sflag, size = 0x8, scoped, tag = 'scoped memory for tpu_custom_call.1']
    %12 = vsyncpa [#allocation3], 0
    %s13 = scalar_lea.sflag [#allocation3], 1
    %14 = vsyncpa %s13, 0
    loop: start=0, step=1, limit=4
    $region2: #{tpu_custom_call.1} parent=1 // loop_pre_header
      _
    $region3: #{tpu_custom_call.1} parent=1 // loop_header
      %s16 = sphi 0, %s20
      %p17 = scmp.ge.s32.totalorder %s16, 4
      %s23 = sphi 0, %s42
      %s24 = sphi 0, %s38
      %s25 = sphi 0, %s34
      %s26 = sphi 0, %s23
      %s27 = sphi 0, %s24
      %s28 = sphi 0, %s25
      %s29 = sphi 0, %s26
      %s30 = sphi 0, %s27
      %s31 = sphi 0, %s28
      %s43 = sphi 0, %s43
      %s45 = sphi 0, %s43
      %s46 = sphi 0, %s45
      %s60 = sphi 0, %s46
      %s70 = sphi 0, %s72
      %s73 = sphi 0, %s70
      %s74 = sphi 0, %s73
      %s90 = sphi 0, %s74
      %s100 = sphi 0, %s102
      %s103 = sphi 0, %s100
      %s104 = sphi 0, %s103
      %s120 = sphi 0, %s104
      %s130 = sphi 0, %s132
      %s133 = sphi 0, %s130
      %s134 = sphi 0, %s133
      %s150 = sphi 0, %s134
      %s160 = sphi 0, %s162
      %s163 = sphi 0, %s160
      %s164 = sphi 0, %s163
      %s180 = sphi 0, %s164
      %s190 = sphi 0, %s192
      %s193 = sphi 0, %s190
      %s194 = sphi 0, %s193
      %s210 = sphi 0, %s194
      %s220 = sphi 0, %s222
      %s223 = sphi 0, %s220
      %s224 = sphi 0, %s223
      %s240 = sphi 0, %s224
    $region4: #{tpu_custom_call.1} parent=1 // loop_header_branch
      %19 = sbr.rel (%p17) target = $region8
    $region5: #{tpu_custom_call.1} parent=1 // loop_body
      %s21 = ssub.s32 %s16, 1
      %s22 = ssub.s32 %s16, 2
      %s32 = sadd.s32 1, %s25
      %p33 = scmp.ge.s32.totalorder %s32, 1
      %s34 = scalar_select %p33, 0, %s32
      %s35 = sadd.s32 1, %s24
      %s36 = scalar_select %p33, %s35, %s24
      %p37 = scmp.ge.s32.totalorder %s36, 2
      %s38 = scalar_select %p37, 0, %s36
      %s39 = sadd.s32 1, %s23
      %s40 = scalar_select %p37, %s39, %s23
      %p41 = scmp.ge.s32.totalorder %s40, 1
      %s42 = scalar_select %p41, 0, %s40
      %s44 = sadd.s32 %s43, 1
      %p47 = scmp.eq.s32.totalorder %s16, 1
      %p48 = scmp.ne.s32.totalorder %s43, %s45
      %p49 = scmp.eq.s32.totalorder %s16, 0
      %p50 = por %p48, %p49
      %p51 = scmp.ne.s32.totalorder %s43, %s45
      %p52 = scmp.eq.s32.totalorder %s21, 1
      %p53 = por %p51, %p52
      %p54 = scmp.ne.s32.totalorder %s45, %s46
      %p55 = scmp.eq.s32.totalorder %s21, 0
      %p56 = por %p54, %p55
      %p57 = scmp.ne.s32.totalorder %s45, %s46
      %p58 = scmp.eq.s32.totalorder %s22, 1
      %p59 = por %p57, %p58
      %p61 = scmp.ne.s32.totalorder %s46, %s60
      %p62 = scmp.eq.s32.totalorder %s22, 0
      %p63 = por %p61, %p62
      %s64 = sadd.s32 %s23, %s25
      %s65 = sadd.s32 %s42, %s34
      %s66 = ssub.s32 %s24, %s38
      %s67 = ssub.s32 %s64, %s65
      %s68 = sor.u32 %s66, %s67
      %p69 = scmp.eq.s32.totalorder %s68, 0
      %s71 = sadd.s32 %s70, 1
      %s72 = scalar_select %p69, %s70, %s71
      %p75 = pneg %p69
      %p76 = scmp.eq.s32.totalorder %s16, 1
      %p77 = por %p75, %p76
      %p78 = scmp.ne.s32.totalorder %s70, %s73
      %p79 = scmp.eq.s32.totalorder %s16, 0
      %p80 = por %p78, %p79
      %p81 = scmp.ne.s32.totalorder %s70, %s73
      %p82 = scmp.eq.s32.totalorder %s21, 1
      %p83 = por %p81, %p82
      %p84 = scmp.ne.s32.totalorder %s73, %s74
      %p85 = scmp.eq.s32.totalorder %s21, 0
      %p86 = por %p84, %p85
      %p87 = scmp.ne.s32.totalorder %s73, %s74
      %p88 = scmp.eq.s32.totalorder %s22, 1
      %p89 = por %p87, %p88
      %p91 = scmp.ne.s32.totalorder %s74, %s90
      %p92 = scmp.eq.s32.totalorder %s22, 0
      %p93 = por %p91, %p92
      %s94 = sadd.s32 %s23, %s25
      %s95 = sadd.s32 %s42, %s34
      %s96 = ssub.s32 %s24, %s38
      %s97 = ssub.s32 %s94, %s95
      %s98 = sor.u32 %s96, %s97
      %p99 = scmp.eq.s32.totalorder %s98, 0
      %s101 = sadd.s32 %s100, 1
      %s102 = scalar_select %p99, %s100, %s101
      %p105 = pneg %p99
      %p106 = scmp.eq.s32.totalorder %s16, 1
      %p107 = por %p105, %p106
      %p108 = scmp.ne.s32.totalorder %s100, %s103
      %p109 = scmp.eq.s32.totalorder %s16, 0
      %p110 = por %p108, %p109
      %p111 = scmp.ne.s32.totalorder %s100, %s103
      %p112 = scmp.eq.s32.totalorder %s21, 1
      %p113 = por %p111, %p112
      %p114 = scmp.ne.s32.totalorder %s103, %s104
      %p115 = scmp.eq.s32.totalorder %s21, 0
      %p116 = por %p114, %p115
      %p117 = scmp.ne.s32.totalorder %s103, %s104
      %p118 = scmp.eq.s32.totalorder %s22, 1
      %p119 = por %p117, %p118
      %p121 = scmp.ne.s32.totalorder %s104, %s120
      %p122 = scmp.eq.s32.totalorder %s22, 0
      %p123 = por %p121, %p122
      %s124 = smul.u32 %s23, 2
      %s125 = sadd.s32 %s124, %s24
      %s126 = smul.u32 %s42, 2
      %s127 = sadd.s32 %s126, %s38
      %s128 = ssub.s32 %s125, %s127
      %p129 = scmp.eq.s32.totalorder %s128, 0
      %s131 = sadd.s32 %s130, 1
      %s132 = scalar_select %p129, %s130, %s131
      %p135 = pneg %p129
      %p136 = scmp.eq.s32.totalorder %s16, 1
      %p137 = por %p135, %p136
      %p138 = scmp.ne.s32.totalorder %s130, %s133
      %p139 = scmp.eq.s32.totalorder %s16, 0
      %p140 = por %p138, %p139
      %p141 = scmp.ne.s32.totalorder %s130, %s133
      %p142 = scmp.eq.s32.totalorder %s21, 1
      %p143 = por %p141, %p142
      %p144 = scmp.ne.s32.totalorder %s133, %s134
      %p145 = scmp.eq.s32.totalorder %s21, 0
      %p146 = por %p144, %p145
      %p147 = scmp.ne.s32.totalorder %s133, %s134
      %p148 = scmp.eq.s32.totalorder %s22, 1
      %p149 = por %p147, %p148
      %p151 = scmp.ne.s32.totalorder %s134, %s150
      %p152 = scmp.eq.s32.totalorder %s22, 0
      %p153 = por %p151, %p152
      %s154 = smul.u32 %s23, 2
      %s155 = sadd.s32 %s154, %s24
      %s156 = smul.u32 %s42, 2
      %s157 = sadd.s32 %s156, %s38
      %s158 = ssub.s32 %s155, %s157
      %p159 = scmp.eq.s32.totalorder %s158, 0
      %s161 = sadd.s32 %s160, 1
      %s162 = scalar_select %p159, %s160, %s161
      %p165 = pneg %p159
      %p166 = scmp.eq.s32.totalorder %s16, 1
      %p167 = por %p165, %p166
      %p168 = scmp.ne.s32.totalorder %s160, %s163
      %p169 = scmp.eq.s32.totalorder %s16, 0
      %p170 = por %p168, %p169
      %p171 = scmp.ne.s32.totalorder %s160, %s163
      %p172 = scmp.eq.s32.totalorder %s21, 1
      %p173 = por %p171, %p172
      %p174 = scmp.ne.s32.totalorder %s163, %s164
      %p175 = scmp.eq.s32.totalorder %s21, 0
      %p176 = por %p174, %p175
      %p177 = scmp.ne.s32.totalorder %s163, %s164
      %p178 = scmp.eq.s32.totalorder %s22, 1
      %p179 = por %p177, %p178
      %p181 = scmp.ne.s32.totalorder %s164, %s180
      %p182 = scmp.eq.s32.totalorder %s22, 0
      %p183 = por %p181, %p182
      %s184 = smul.u32 %s23, 2
      %s185 = sadd.s32 %s184, %s24
      %s186 = smul.u32 %s42, 2
      %s187 = sadd.s32 %s186, %s38
      %s188 = ssub.s32 %s185, %s187
      %p189 = scmp.eq.s32.totalorder %s188, 0
      %s191 = sadd.s32 %s190, 1
      %s192 = scalar_select %p189, %s190, %s191
      %p195 = pneg %p189
      %p196 = scmp.eq.s32.totalorder %s16, 1
      %p197 = por %p195, %p196
      %p198 = scmp.ne.s32.totalorder %s190, %s193
      %p199 = scmp.eq.s32.totalorder %s16, 0
      %p200 = por %p198, %p199
      %p201 = scmp.ne.s32.totalorder %s190, %s193
      %p202 = scmp.eq.s32.totalorder %s21, 1
      %p203 = por %p201, %p202
      %p204 = scmp.ne.s32.totalorder %s193, %s194
      %p205 = scmp.eq.s32.totalorder %s21, 0
      %p206 = por %p204, %p205
      %p207 = scmp.ne.s32.totalorder %s193, %s194
      %p208 = scmp.eq.s32.totalorder %s22, 1
      %p209 = por %p207, %p208
      %p211 = scmp.ne.s32.totalorder %s194, %s210
      %p212 = scmp.eq.s32.totalorder %s22, 0
      %p213 = por %p211, %p212
      %s214 = smul.u32 %s23, 2
      %s215 = sadd.s32 %s214, %s24
      %s216 = smul.u32 %s42, 2
      %s217 = sadd.s32 %s216, %s38
      %s218 = ssub.s32 %s215, %s217
      %p219 = scmp.eq.s32.totalorder %s218, 0
      %s221 = sadd.s32 %s220, 1
      %s222 = scalar_select %p219, %s220, %s221
      %p225 = pneg %p219
      %p226 = scmp.eq.s32.totalorder %s16, 1
      %p227 = por %p225, %p226
      %p228 = scmp.ne.s32.totalorder %s220, %s223
      %p229 = scmp.eq.s32.totalorder %s16, 0
      %p230 = por %p228, %p229
      %p231 = scmp.ne.s32.totalorder %s220, %s223
      %p232 = scmp.eq.s32.totalorder %s21, 1
      %p233 = por %p231, %p232
      %p234 = scmp.ne.s32.totalorder %s223, %s224
      %p235 = scmp.eq.s32.totalorder %s21, 0
      %p236 = por %p234, %p235
      %p237 = scmp.ne.s32.totalorder %s223, %s224
      %p238 = scmp.eq.s32.totalorder %s22, 1
      %p239 = por %p237, %p238
      %p241 = scmp.ne.s32.totalorder %s224, %s240
      %p242 = scmp.eq.s32.totalorder %s22, 0
      %p243 = por %p241, %p242
      %p244 = scmp.le.s32.totalorder 1, %s16
      %p245 = scmp.lt.s32.totalorder %s16, 3
      %p246 = pnand %p244, %p245
      %p247 = pneg %p246
      // Predicated region
      $region9: #{tpu_custom_call.1} parent=5 // pred_check
        _
      $region10: #{tpu_custom_call.1} parent=5 // pred_check_branch
        %249 = sbr.rel (%p246) target = $region12
      $region11: #{tpu_custom_call.1} parent=5 // pred_region
        %s250 = ssub.s32 %s16, 1
        // Predicated region
        $region13: #{tpu_custom_call.1} parent=11 // pred_check
          %p251 = pneg %p56
        $region14: #{tpu_custom_call.1} parent=11 // pred_check_branch
          %253 = sbr.rel (%p251) target = $region16
        $region15: #{tpu_custom_call.1} parent=11 // pred_region
          _
        $region16: #{tpu_custom_call.1} parent=11 // pred_fallthru
          _
      $region12: #{tpu_custom_call.1} parent=5 // pred_fallthru
        _
      %p254 = scmp.lt.s32.totalorder %s16, 2
      // Predicated region
      $region17: #{tpu_custom_call.1} parent=5 // pred_check
        %p255 = pneg %p254
      $region18: #{tpu_custom_call.1} parent=5 // pred_check_branch
        %257 = sbr.rel (%p255) target = $region20
      $region19: #{tpu_custom_call.1} parent=5 // pred_region
        // Predicated region
        $region21: #{tpu_custom_call.1} parent=19 // pred_check
          %p258 = pneg %p80
        $region22: #{tpu_custom_call.1} parent=19 // pred_check_branch
          %260 = sbr.rel (%p258) target = $region24
        $region23: #{tpu_custom_call.1} parent=19 // pred_region
          %s261 = sand.u32 %s70, 1
          %s262 = scalar_lea.sflag [#allocation3], %s261
          %s263 = sand.u32 %s70, 1
          %s264 = smul.addr %s263, 32
          %s265 = scalar_lea.vmem [#allocation2], %s264
          %s266 = sadd.s32 %s23, %s25
          %s268 = ssub.s32 512, 512
          %269 = vsyncadd %s262, %s268
          %s270 = smul.addr %s24, 4
          %s271 = sadd.s32 %s266, %s270
          %s272 = smul.addr %s271, 128
          %s273 = scalar_lea.hbm %s1, %s272
          %s274 = sshll.u32 %s265, 4
          %s275 = int_to_ptr.vmem [resolvable:$true] %s274
          %280 = dma.hbm_to_vmem [thread:$0]  %s273, 512, %s275, %s262, 128, 128, 8
        $region24: #{tpu_custom_call.1} parent=19 // pred_fallthru
          _
        // Predicated region
        $region25: #{tpu_custom_call.1} parent=19 // pred_check
          %p281 = pneg %p110
        $region26: #{tpu_custom_call.1} parent=19 // pred_check_branch
          %283 = sbr.rel (%p281) target = $region28
        $region27: #{tpu_custom_call.1} parent=19 // pred_region
          %s284 = sadd.s32 %s23, %s25
          %p285 = scmp.lt.s32.totalorder %s24, 1
          %s286 = scalar_select %p285, %s24, 1
          %p287 = scmp.lt.s32.totalorder %s284, 0
          %s288 = scalar_select %p287, %s284, 0
          %s289 = sadd.s32 %s288, %s286
          %s290 = smul.addr %s289, 8
          %s291 = scalar_lea.vmem %s2, %s290
          %s292 = sadd.s32 %s23, %s25
        $region28: #{tpu_custom_call.1} parent=19 // pred_fallthru
          _
      $region20: #{tpu_custom_call.1} parent=5 // pred_fallthru
        _
      %p293 = scmp.le.s32.totalorder 1, %s16
      %p294 = scmp.lt.s32.totalorder %s16, 3
      %p295 = pnand %p293, %p294
      %p296 = pneg %p295
      // Predicated region
      $region29: #{tpu_custom_call.1} parent=5 // pred_check
        _
      $region30: #{tpu_custom_call.1} parent=5 // pred_check_branch
        %298 = sbr.rel (%p295) target = $region32
      $region31: #{tpu_custom_call.1} parent=5 // pred_region
        %s299 = ssub.s32 %s16, 1
        %s300 = sand.u32 %s73, 1
        %s301 = scalar_lea.sflag [#allocation3], %s300
        %s302 = sand.u32 %s73, 1
        %s303 = smul.addr %s302, 32
        %s304 = scalar_lea.vmem [#allocation2], %s303
        // Predicated region
        $region33: #{tpu_custom_call.1} parent=31 // pred_check
          %p305 = pneg %p86
        $region34: #{tpu_custom_call.1} parent=31 // pred_check_branch
          %307 = sbr.rel (%p305) target = $region36
        $region35: #{tpu_custom_call.1} parent=31 // pred_region
          %308 = dma.done %s301, 512
        $region36: #{tpu_custom_call.1} parent=31 // pred_fallthru
          _
        %p309 = pneg %p56
        %p310 = pneg %p53
        %s311 = sand.u32 %s73, 1
        %s312 = scalar_lea.sflag [#allocation3], %s311
        %s313 = sand.u32 %s73, 1
        %s314 = smul.addr %s313, 32
        %s315 = scalar_lea.vmem [#allocation2], %s314
        %p316 = pneg %p86
        %p317 = pneg %p83
        %s318 = sadd.s32 %s26, %s28
        %p319 = scmp.lt.s32.totalorder %s27, 1
        %s320 = scalar_select %p319, %s27, 1
        %p321 = scmp.lt.s32.totalorder %s318, 0
        %s322 = scalar_select %p321, %s318, 0
        %s323 = sadd.s32 %s322, %s320
        %s324 = smul.addr %s323, 8
        %s325 = scalar_lea.vmem %s2, %s324
        %p326 = pneg %p116
        %p327 = pneg %p113
        %p328 = pneg %p146
        %p329 = pneg %p143
        %s330 = smul.u32 %s26, 2
        %s331 = sadd.s32 %s330, %s27
        %p332 = scmp.lt.s32.totalorder %s331, 1
        %s333 = scalar_select %p332, %s331, 1
        %s334 = smul.addr %s333, 4
        %s335 = smul.addr %s334, 8
        %s336 = scalar_lea.vmem %s3, %s335
        %p337 = pneg %p176
        %p338 = pneg %p173
        %s339 = smul.u32 %s26, 2
        %s340 = sadd.s32 %s339, %s27
        %p341 = scmp.lt.s32.totalorder %s340, 1
        %s342 = scalar_select %p341, %s340, 1
        %s343 = smul.addr %s342, 4
        %s344 = smul.addr %s343, 8
        %s345 = scalar_lea.vmem %s4, %s344
        %p346 = pneg %p206
        %p347 = pneg %p203
        %s348 = smul.u32 %s26, 2
        %s349 = sadd.s32 %s348, %s27
        %p350 = scmp.lt.s32.totalorder %s349, 1
        %s351 = scalar_select %p350, %s349, 1
        %s352 = smul.addr %s351, 4
        %s353 = smul.addr %s352, 8
        %s354 = scalar_lea.vmem %s5, %s353
        %p355 = pneg %p236
        %p356 = pneg %p233
        %s357 = smul.u32 %s26, 2
        %s358 = sadd.s32 %s357, %s27
        %p359 = scmp.lt.s32.totalorder %s358, 1
        %s360 = scalar_select %p359, %s358, 1
        %s361 = smul.addr %s360, 8
        %s362 = scalar_lea.vmem %s6, %s361
        %s363 = sadd.s32 %s26, %s28
        %s364 = sadd.s32 %s26, %s28
        %p365 = scmp.lt.s32.totalorder %s27, 1
        %s366 = scalar_select %p365, %s27, 1
        %p367 = scmp.lt.s32.totalorder %s364, 0
        %s368 = scalar_select %p367, %s364, 0
        %s369 = sadd.s32 %s368, %s366
        %s370 = smul.addr %s369, 8
        %s371 = scalar_lea.vmem %s2, %s370
        %s372 = sadd.s32 %s26, %s28
        %s373 = smul.u32 %s26, 2
        %s374 = sadd.s32 %s373, %s27
        %p375 = scmp.lt.s32.totalorder %s374, 1
        %s376 = scalar_select %p375, %s374, 1
        %s377 = smul.addr %s376, 4
        %s378 = smul.addr %s377, 8
        %s379 = scalar_lea.vmem %s3, %s378
        %s380 = smul.u32 %s26, 2
        %s381 = sadd.s32 %s380, %s27
        %s382 = smul.u32 %s26, 2
        %s383 = sadd.s32 %s382, %s27
        %p384 = scmp.lt.s32.totalorder %s383, 1
        %s385 = scalar_select %p384, %s383, 1
        %s386 = smul.addr %s385, 4
        %s387 = smul.addr %s386, 8
        %s388 = scalar_lea.vmem %s4, %s387
        %s389 = smul.u32 %s26, 2
        %s390 = sadd.s32 %s389, %s27
        %s391 = smul.u32 %s26, 2
        %s392 = sadd.s32 %s391, %s27
        %p393 = scmp.lt.s32.totalorder %s392, 1
        %s394 = scalar_select %p393, %s392, 1
        %s395 = smul.addr %s394, 4
        %s396 = smul.addr %s395, 8
        %s397 = scalar_lea.vmem %s5, %s396
        %s398 = smul.u32 %s26, 2
        %s399 = sadd.s32 %s398, %s27
        %s400 = smul.u32 %s26, 2
        %s401 = sadd.s32 %s400, %s27
        %p402 = scmp.lt.s32.totalorder %s401, 1
        %s403 = scalar_select %p402, %s401, 1
        %s404 = smul.addr %s403, 8
        %s405 = scalar_lea.vmem %s6, %s404
        %s406 = smul.u32 %s26, 2
        %s407 = sadd.s32 %s406, %s27
        %p408 = scmp.eq.s32.totalorder %s28, 0
        // Predicated region
        $region37: #{tpu_custom_call.1} parent=31 // pred_check
          %p409 = pneg %p408
        $region38: #{tpu_custom_call.1} parent=31 // pred_check_branch
          %411 = sbr.rel (%p409) target = $region40
        $region39: #{tpu_custom_call.1} parent=31 // pred_region
          %vm412 = vcmask 7168
          %413 = vst.msk [vmem:[%s379] sm:$0xff] %vm412, 0.0
          %414 = vst.msk [vmem:[%s379 + $0x8] sm:$0xff] %vm412, 0.0
          %415 = vst.msk [vmem:[%s379 + $0x10] sm:$0xff] %vm412, 0.0
          %416 = vst.msk [vmem:[%s379 + $0x18] sm:$0xff] %vm412, 0.0
          %417 = vst.msk [vmem:[%s388] sm:$0xff] %vm412, 0.0
          %418 = vst.msk [vmem:[%s388 + $0x8] sm:$0xff] %vm412, 0.0
          %419 = vst.msk [vmem:[%s388 + $0x10] sm:$0xff] %vm412, 0.0
          %420 = vst.msk [vmem:[%s388 + $0x18] sm:$0xff] %vm412, 0.0
          %421 = vst.msk [vmem:[%s397] sm:$0xff] %vm412, 0.0
          %422 = vst.msk [vmem:[%s397 + $0x8] sm:$0xff] %vm412, 0.0
          %423 = vst.msk [vmem:[%s397 + $0x10] sm:$0xff] %vm412, 0.0
          %424 = vst.msk [vmem:[%s397 + $0x18] sm:$0xff] %vm412, 0.0
          %425 = vst.msk [vmem:[%s405] sm:$0xff] %vm412, 0.0
        $region40: #{tpu_custom_call.1} parent=31 // pred_fallthru
          _
        %v426 = vld [vmem:[%s304] sm:$0xff]
        %v427 = vld [vmem:[%s304 + $0x8] sm:$0xff]
        %v428 = vld [vmem:[%s304 + $0x10] sm:$0xff]
        %v429 = vld [vmem:[%s304 + $0x18] sm:$0xff]
        %v430 = vld [vmem:[%s371] sm:$0xff]
        %v431 = vld [vmem:[%s0] sm:$0xff]
        %v432 = vld [vmem:[%s0 + $0x8] sm:$0xff]
        %v433 = vld [vmem:[%s0 + $0x10] sm:$0xff]
        %v434 = vld [vmem:[%s0 + $0x18] sm:$0xff]
        %vm435 = vcmask 261120
        %v436 = vsel %vm435, %v426, -inf
        %v437 = vsel %vm435, %v427, -inf
        %v438 = vsel %vm435, %v428, -inf
        %v439 = vsel %vm435, %v429, -inf
        %v440 = vmax.f32 %v436, %v437
        %v441 = vmax.f32 %v438, %v439
        %v442 = vmax.f32 %v440, %v441
        %v443 = vsub.f32 %v426, %v442
        %v444 = vsub.f32 %v427, %v442
        %v445 = vsub.f32 %v428, %v442
        %v446 = vsub.f32 %v429, %v442
        %v447 = vmul.f32 %v443, 1.442695
        %v448 = vpow.pop %v447
        %v449 = vmul.f32 %v444, 1.442695
        %v450 = vpow.pop %v449
        %v451 = vmul.f32 %v445, 1.442695
        %v452 = vpow.pop %v451
        %v453 = vmul.f32 %v446, 1.442695
        %v454 = vpow.pop %v453
        %v455 = vsel %vm435, %v448, 0.0
        %v456 = vsel %vm435, %v450, 0.0
        %v457 = vadd.f32 %v455, %v456
        %v458 = vsel %vm435, %v452, 0.0
        %v459 = vadd.f32 %v457, %v458
        %v460 = vsel %vm435, %v454, 0.0
        %v461 = vadd.f32 %v459, %v460
        %v462 = vrcp.pop %v461
        %v463 = vmul.f32 1.0, %v462
        %v464 = vmul.f32 %v448, %v463
        %v465 = vmul.f32 %v450, %v463
        %v466 = vmul.f32 %v452, %v463
        %v467 = vmul.f32 %v454, %v463
        %v468 = vlog2.pop %v461
        %v469 = vmul.f32 %v468, 0.6931472
        %v470 = vadd.f32 %v442, %v469
        %471 = vset.pattern.permute.xlu0 0
        %472 = vperm.xlu0 %471, %v431
        %v473 = vpop.permute.xlu0 %472
        %474 = vset.pattern.permute.xlu0 0
        %475 = vperm.xlu0 %474, %v432
        %v476 = vpop.permute.xlu0 %475
        %477 = vset.pattern.permute.xlu0 0
        %478 = vperm.xlu0 %477, %v433
        %v479 = vpop.permute.xlu0 %478
        %480 = vset.pattern.permute.xlu0 0
        %481 = vperm.xlu0 %480, %v434
        %v482 = vpop.permute.xlu0 %481
        %vm483 = vcmp.eq.s32.totalorder %v473, %v430
        %vm484 = vcmp.eq.s32.totalorder %v476, %v430
        %vm485 = vcmp.eq.s32.totalorder %v479, %v430
        %vm486 = vcmp.eq.s32.totalorder %v482, %v430
        %v487 = vsel %vm483, %v426, 0.0
        %v488 = vsel %vm484, %v427, 0.0
        %v489 = vsel %vm485, %v428, 0.0
        %v490 = vsel %vm486, %v429, 0.0
        %v491 = vsel %vm435, %v487, 0.0
        %v492 = vsel %vm435, %v488, 0.0
        %v493 = vadd.f32 %v491, %v492
        %v494 = vsel %vm435, %v489, 0.0
        %v495 = vadd.f32 %v493, %v494
        %v496 = vsel %vm435, %v490, 0.0
        %v497 = vadd.f32 %v495, %v496
        %v498 = vsub.f32 %v470, %v497
        %v499 = vld [vmem:[%s379] sm:$0xff]
        %v500 = vld [vmem:[%s379 + $0x8] sm:$0xff]
        %v501 = vld [vmem:[%s379 + $0x10] sm:$0xff]
        %v502 = vld [vmem:[%s379 + $0x18] sm:$0xff]
        %v503 = vsel %vm483, %v464, 0.0
        %v504 = vsel %vm484, %v465, 0.0
        %v505 = vsel %vm485, %v466, 0.0
        %v506 = vsel %vm486, %v467, 0.0
        %v507 = vsel %vm435, %v503, 0.0
        %508 = vadd.xlane.f32.xlu0 %v507
        %v509 = vpop.xlane.xlu0 %508
        %v510 = vsel %vm435, %v504, 0.0
        %511 = vadd.xlane.f32.xlu0 %v510
        %v512 = vpop.xlane.xlu0 %511
        %v513 = vsel %vm435, %v505, 0.0
        %514 = vadd.xlane.f32.xlu0 %v513
        %v515 = vpop.xlane.xlu0 %514
        %v516 = vsel %vm435, %v506, 0.0
        %517 = vadd.xlane.f32.xlu0 %v516
        %v518 = vpop.xlane.xlu0 %517
        %v519 = vadd.f32 %v499, %v509
        %v520 = vadd.f32 %v500, %v512
        %v521 = vadd.f32 %v501, %v515
        %v522 = vadd.f32 %v502, %v518
        %vm523 = vcmask 7168
        %524 = vst.msk [vmem:[%s379] sm:$0xff] %vm523, %v519
        %525 = vst.msk [vmem:[%s379 + $0x8] sm:$0xff] %vm523, %v520
        %526 = vst.msk [vmem:[%s379 + $0x10] sm:$0xff] %vm523, %v521
        %527 = vst.msk [vmem:[%s379 + $0x18] sm:$0xff] %vm523, %v522
        %v528 = vld [vmem:[%s388] sm:$0xff]
        %v529 = vld [vmem:[%s388 + $0x8] sm:$0xff]
        %v530 = vld [vmem:[%s388 + $0x10] sm:$0xff]
        %v531 = vld [vmem:[%s388 + $0x18] sm:$0xff]
        %v532 = vsel %vm435, %v464, 0.0
        %533 = vadd.xlane.f32.xlu0 %v532
        %v534 = vpop.xlane.xlu0 %533
        %v535 = vsel %vm435, %v465, 0.0
        %536 = vadd.xlane.f32.xlu0 %v535
        %v537 = vpop.xlane.xlu0 %536
        %v538 = vsel %vm435, %v466, 0.0
        %539 = vadd.xlane.f32.xlu0 %v538
        %v540 = vpop.xlane.xlu0 %539
        %v541 = vsel %vm435, %v467, 0.0
        %542 = vadd.xlane.f32.xlu0 %v541
        %v543 = vpop.xlane.xlu0 %542
        %v544 = vadd.f32 %v528, %v534
        %v545 = vadd.f32 %v529, %v537
        %v546 = vadd.f32 %v530, %v540
        %v547 = vadd.f32 %v531, %v543
        %548 = vst.msk [vmem:[%s388] sm:$0xff] %vm523, %v544
        %549 = vst.msk [vmem:[%s388 + $0x8] sm:$0xff] %vm523, %v545
        %550 = vst.msk [vmem:[%s388 + $0x10] sm:$0xff] %vm523, %v546
        %551 = vst.msk [vmem:[%s388 + $0x18] sm:$0xff] %vm523, %v547
        %v552 = vld [vmem:[%s397] sm:$0xff]
        %v553 = vld [vmem:[%s397 + $0x8] sm:$0xff]
        %v554 = vld [vmem:[%s397 + $0x10] sm:$0xff]
        %v555 = vld [vmem:[%s397 + $0x18] sm:$0xff]
        %v556 = vsel %vm483, 1, 0
        %v557 = vsel %vm484, 1, 0
        %v558 = vsel %vm485, 1, 0
        %v559 = vsel %vm486, 1, 0
        %v560 = vcvt.s32.f32 %v556
        %v561 = vcvt.s32.f32 %v557
        %v562 = vcvt.s32.f32 %v558
        %v563 = vcvt.s32.f32 %v559
        %v564 = vsel %vm435, %v560, 0.0
        %565 = vadd.xlane.f32.xlu0 %v564
        %v566 = vpop.xlane.xlu0 %565
        %v567 = vsel %vm435, %v561, 0.0
        %568 = vadd.xlane.f32.xlu0 %v567
        %v569 = vpop.xlane.xlu0 %568
        %v570 = vsel %vm435, %v562, 0.0
        %571 = vadd.xlane.f32.xlu0 %v570
        %v572 = vpop.xlane.xlu0 %571
        %v573 = vsel %vm435, %v563, 0.0
        %574 = vadd.xlane.f32.xlu0 %v573
        %v575 = vpop.xlane.xlu0 %574
        %v576 = vadd.f32 %v552, %v566
        %v577 = vadd.f32 %v553, %v569
        %v578 = vadd.f32 %v554, %v572
        %v579 = vadd.f32 %v555, %v575
        %580 = vst.msk [vmem:[%s397] sm:$0xff] %vm523, %v576
        %581 = vst.msk [vmem:[%s397 + $0x8] sm:$0xff] %vm523, %v577
        %582 = vst.msk [vmem:[%s397 + $0x10] sm:$0xff] %vm523, %v578
        %583 = vst.msk [vmem:[%s397 + $0x18] sm:$0xff] %vm523, %v579
        %v584 = vld [vmem:[%s405] sm:$0xff]
        %v585 = vsel %vm435, %v498, 0.0
        %586 = vadd.xlane.f32.xlu0 %v585
        %v587 = vpop.xlane.xlu0 %586
        %v588 = vadd.f32 %v584, %v587
        %589 = vst.msk [vmem:[%s405] sm:$0xff] %vm523, %v588
        %s590 = smul.u32 %s26, 2
        %s591 = sadd.s32 %s590, %s27
        %p592 = scmp.lt.s32.totalorder %s591, 1
        %s593 = scalar_select %p592, %s591, 1
        %s594 = smul.addr %s593, 4
        %s595 = smul.addr %s594, 8
        %s596 = scalar_lea.vmem %s3, %s595
        %s597 = smul.u32 %s26, 2
        %s598 = sadd.s32 %s597, %s27
        %p599 = scmp.lt.s32.totalorder %s598, 1
        %s600 = scalar_select %p599, %s598, 1
        %s601 = smul.addr %s600, 4
        %s602 = smul.addr %s601, 8
        %s603 = scalar_lea.vmem %s4, %s602
        %s604 = smul.u32 %s26, 2
        %s605 = sadd.s32 %s604, %s27
        %p606 = scmp.lt.s32.totalorder %s605, 1
        %s607 = scalar_select %p606, %s605, 1
        %s608 = smul.addr %s607, 4
        %s609 = smul.addr %s608, 8
        %s610 = scalar_lea.vmem %s5, %s609
        %s611 = smul.u32 %s26, 2
        %s612 = sadd.s32 %s611, %s27
        %p613 = scmp.lt.s32.totalorder %s612, 1
        %s614 = scalar_select %p613, %s612, 1
        %s615 = smul.addr %s614, 8
        %s616 = scalar_lea.vmem %s6, %s615
        // Predicated region
        $region41: #{tpu_custom_call.1} parent=31 // pred_check
          %p617 = pneg %p143
        $region42: #{tpu_custom_call.1} parent=31 // pred_check_branch
          %619 = sbr.rel (%p617) target = $region44
        $region43: #{tpu_custom_call.1} parent=31 // pred_region
          %s620 = smul.u32 %s26, 2
          %s621 = sadd.s32 %s620, %s27
        $region44: #{tpu_custom_call.1} parent=31 // pred_fallthru
          _
        // Predicated region
        $region45: #{tpu_custom_call.1} parent=31 // pred_check
          %p622 = pneg %p173
        $region46: #{tpu_custom_call.1} parent=31 // pred_check_branch
          %624 = sbr.rel (%p622) target = $region48
        $region47: #{tpu_custom_call.1} parent=31 // pred_region
          %s625 = smul.u32 %s26, 2
          %s626 = sadd.s32 %s625, %s27
        $region48: #{tpu_custom_call.1} parent=31 // pred_fallthru
          _
        // Predicated region
        $region49: #{tpu_custom_call.1} parent=31 // pred_check
          %p627 = pneg %p203
        $region50: #{tpu_custom_call.1} parent=31 // pred_check_branch
          %629 = sbr.rel (%p627) target = $region52
        $region51: #{tpu_custom_call.1} parent=31 // pred_region
          %s630 = smul.u32 %s26, 2
          %s631 = sadd.s32 %s630, %s27
        $region52: #{tpu_custom_call.1} parent=31 // pred_fallthru
          _
        // Predicated region
        $region53: #{tpu_custom_call.1} parent=31 // pred_check
          %p632 = pneg %p233
        $region54: #{tpu_custom_call.1} parent=31 // pred_check_branch
          %634 = sbr.rel (%p632) target = $region56
        $region55: #{tpu_custom_call.1} parent=31 // pred_region
          %s635 = smul.u32 %s26, 2
          %s636 = sadd.s32 %s635, %s27
        $region56: #{tpu_custom_call.1} parent=31 // pred_fallthru
          _
      $region32: #{tpu_custom_call.1} parent=5 // pred_fallthru
        _
      %p637 = scmp.le.s32.totalorder 2, %s16
      // Predicated region
      $region57: #{tpu_custom_call.1} parent=5 // pred_check
        %p638 = pneg %p637
      $region58: #{tpu_custom_call.1} parent=5 // pred_check_branch
        %640 = sbr.rel (%p638) target = $region60
      $region59: #{tpu_custom_call.1} parent=5 // pred_region
        %s641 = ssub.s32 %s16, 2
        // Predicated region
        $region61: #{tpu_custom_call.1} parent=59 // pred_check
          %p642 = pneg %p149
        $region62: #{tpu_custom_call.1} parent=59 // pred_check_branch
          %644 = sbr.rel (%p642) target = $region64
        $region63: #{tpu_custom_call.1} parent=59 // pred_region
          %s645 = smul.u32 %s29, 2
          %s646 = sadd.s32 %s645, %s30
          %p647 = scmp.lt.s32.totalorder %s646, 1
          %s648 = scalar_select %p647, %s646, 1
          %s649 = smul.addr %s648, 4
          %s650 = smul.addr %s649, 8
          %s651 = scalar_lea.vmem %s3, %s650
        $region64: #{tpu_custom_call.1} parent=59 // pred_fallthru
          _
        // Predicated region
        $region65: #{tpu_custom_call.1} parent=59 // pred_check
          %p652 = pneg %p179
        $region66: #{tpu_custom_call.1} parent=59 // pred_check_branch
          %654 = sbr.rel (%p652) target = $region68
        $region67: #{tpu_custom_call.1} parent=59 // pred_region
          %s655 = smul.u32 %s29, 2
          %s656 = sadd.s32 %s655, %s30
          %p657 = scmp.lt.s32.totalorder %s656, 1
          %s658 = scalar_select %p657, %s656, 1
          %s659 = smul.addr %s658, 4
          %s660 = smul.addr %s659, 8
          %s661 = scalar_lea.vmem %s4, %s660
        $region68: #{tpu_custom_call.1} parent=59 // pred_fallthru
          _
        // Predicated region
        $region69: #{tpu_custom_call.1} parent=59 // pred_check
          %p662 = pneg %p209
        $region70: #{tpu_custom_call.1} parent=59 // pred_check_branch
          %664 = sbr.rel (%p662) target = $region72
        $region71: #{tpu_custom_call.1} parent=59 // pred_region
          %s665 = smul.u32 %s29, 2
          %s666 = sadd.s32 %s665, %s30
          %p667 = scmp.lt.s32.totalorder %s666, 1
          %s668 = scalar_select %p667, %s666, 1
          %s669 = smul.addr %s668, 4
          %s670 = smul.addr %s669, 8
          %s671 = scalar_lea.vmem %s5, %s670
        $region72: #{tpu_custom_call.1} parent=59 // pred_fallthru
          _
        // Predicated region
        $region73: #{tpu_custom_call.1} parent=59 // pred_check
          %p672 = pneg %p239
        $region74: #{tpu_custom_call.1} parent=59 // pred_check_branch
          %674 = sbr.rel (%p672) target = $region76
        $region75: #{tpu_custom_call.1} parent=59 // pred_region
          %s675 = smul.u32 %s29, 2
          %s676 = sadd.s32 %s675, %s30
          %p677 = scmp.lt.s32.totalorder %s676, 1
          %s678 = scalar_select %p677, %s676, 1
          %s679 = smul.addr %s678, 8
          %s680 = scalar_lea.vmem %s6, %s679
        $region76: #{tpu_custom_call.1} parent=59 // pred_fallthru
          _
      $region60: #{tpu_custom_call.1} parent=5 // pred_fallthru
        _
    $region6: #{tpu_custom_call.1} parent=1 // loop_footer
      %s20 = sadd.s32 1, %s16
    $region7: #{tpu_custom_call.1} parent=1 // loop_footer_branch
      %15 = sbr.rel target = $region3
    $region8: #{tpu_custom_call.1} parent=1 // loop_exit
      _
    %681 = vsyncpa [#allocation3], 1
    %s682 = scalar_lea.sflag [#allocation3], 1
    %683 = vsyncpa %s682, 1

</llo_original>
